<compile_context>
chip_gen: v5e
topology: v5e:2x2
jax: 0.10.0
libtpu: 0.0.40
codegen_flags: <defaults>
</compile_context>

<pallas_src>
import jax
import jax.numpy as jnp
from jax import lax
from jax.experimental import pallas as pl
from jax.experimental.pallas import tpu as pltpu


def _round_up(n, m):
    return ((n + m - 1) // m) * m


def extract_patches(x, patch_size, stride=1):
    """x: (1, C, H, W) NCHW. Returns (L, C*p*p), identical ordering to torch unfold."""
    assert stride == 1, "Only support stride of 1"
    _, C, H, W = x.shape
    p = patch_size
    Ho, Wo = H - p + 1, W - p + 1
    cols = []
    for i in range(p):
        for j in range(p):
            cols.append(x[0, :, i:i + Ho, j:j + Wo])       # (C, Ho, Wo)
    patches = jnp.stack(cols, axis=1)                       # (C, p*p, Ho, Wo)
    patches = patches.reshape(C * p * p, Ho * Wo)           # (C*p*p, L) — unfold layout
    return patches.T                                        # (L, C*p*p)


def _min_dist_kernel(x_ref, y_ref, y2_ref, o_ref, min_scratch):
    """One (TM, TN) tile: s = |y|^2 - 2 x.y (f32), running elementwise min over j.

    |x|^2 and the 1/d scaling are added outside the kernel (they do not affect the
    argmin over j). The cross-lane (TM, TN) -> (TM, 1) reduction runs only once per
    i-block, in the j == last branch.
    """
    j = pl.program_id(1)

    @pl.when(j == 0)
    def _():
        min_scratch[...] = jnp.full_like(min_scratch, jnp.inf)

    # bf16 x bf16 -> f32 on the MXU; contract the minor dims directly so no explicit
    # transpose of the (TN, Dp) y tile is materialized.
    xy = lax.dot_general(
        x_ref[...], y_ref[...],
        dimension_numbers=(((1,), (1,)), ((), ())),
        preferred_element_type=jnp.float32)                  # (TM, TN) f32
    s = y2_ref[...] - 2.0 * xy                               # (1, TN) broadcast, f32
    min_scratch[...] = jnp.minimum(min_scratch[...], s)      # VALU running min

    @pl.when(j == pl.num_programs(1) - 1)
    def _():
        # Output is a (TM, 1) column; written only once per i-block, so the
        # masked-store cost is negligible (a lane-dense (1, TM) layout would need an
        # in-kernel transpose of the reduced column — a wash).
        o_ref[...] = jnp.min(min_scratch[...], axis=1, keepdims=True)


def min_nn_dists(x_patches, y_patches, *, tm=2048, tn=512):
    """Per-row min of the normalized pairwise squared-distance matrix, via Pallas.

    dist[i, j] = (|x_i|^2 + |y_j|^2 - 2 x_i . y_j) / d ;  returns min_j dist[i, :].

    Large TM => the Y matrix is re-streamed from HBM only ceil(nx/TM) times; large
    TM*TN amortizes the per-grid-step overhead (~0.35 us).  bf16 patch storage halves
    the Y DMA bytes.  Note: d (=C*p*p) is lane-padded to a multiple of 128, so MXU
    FLOP efficiency is capped at d/dp of peak for this patch size — expected.
    """
    nx, d = x_patches.shape
    ny, _ = y_patches.shape
    x_f32 = x_patches.astype(jnp.float32)
    y_f32 = y_patches.astype(jnp.float32)

    tm = min(tm, _round_up(nx, 128))
    tn = min(tn, _round_up(ny, 128))
    dp = _round_up(d, 128)          # zero-pad feature dim (zeros don't change distances)

    # Keep double-buffered inputs + scratch comfortably inside the default scoped VMEM.
    def _vmem_bytes(tm_, tn_):
        return 2 * (tm_ * dp * 2) + 2 * (tn_ * dp * 2) + tm_ * tn_ * 4
    while _vmem_bytes(tm, tn) > (24 << 20) and tm > 256:
        tm //= 2
    while _vmem_bytes(tm, tn) > (24 << 20) and tn > 256:
        tn //= 2

    nxp = _round_up(nx, tm)         # zero-pad X rows (discarded before the mean)
    nyp = _round_up(ny, tn)         # zero-pad Y rows (masked out via y2 = +inf)

    # bf16 patch matrices for the MXU (feature dim zero-padded to dp).
    xp = jnp.zeros((nxp, dp), jnp.bfloat16).at[:nx, :d].set(x_f32.astype(jnp.bfloat16))
    yp = jnp.zeros((nyp, dp), jnp.bfloat16).at[:ny, :d].set(y_f32.astype(jnp.bfloat16))

    # Norms hoisted out of the kernel inner loop; computed once, in f32.
    # Padded Y columns get +inf so they can never win the min.
    y2 = jnp.full((1, nyp), jnp.inf, jnp.float32).at[0, :ny].set(
        jnp.sum(y_f32 * y_f32, axis=1))
    x2 = jnp.sum(x_f32 * x_f32, axis=1)                      # (nx,)

    out = pl.pallas_call(
        _min_dist_kernel,
        out_shape=jax.ShapeDtypeStruct((nxp, 1), jnp.float32),
        grid_spec=pltpu.PrefetchScalarGridSpec(
            num_scalar_prefetch=0,
            grid=(nxp // tm, nyp // tn),
            in_specs=[
                pl.BlockSpec((tm, dp), lambda i, j: (i, 0)),
                # TODO(synk): if the Y DMA is still exposed after bf16 + large tiles,
                # try pipeline_mode=pl.Buffered(3) here (measure first).
                pl.BlockSpec((tn, dp), lambda i, j: (j, 0)),
                pl.BlockSpec((1, tn), lambda i, j: (0, j)),
            ],
            out_specs=pl.BlockSpec((tm, 1), lambda i, j: (i, 0)),
            scratch_shapes=[pltpu.VMEM((tm, tn), jnp.float32)],
        ),
        compiler_params=pltpu.CompilerParams(
            dimension_semantics=("parallel", "arbitrary")),
    )(xp, yp, y2)
    # Add |x|^2 and the 1/d normalization outside (they don't change argmin_j).
    return (out[:nx, 0] + x2) * (1.0 / float(d))


class PatchCoherentLoss:
    """JAX/Pallas port of the PyTorch PatchCoherentLoss (alpha=None, loop=False path)."""

    def __init__(self, patch_size=7, stride=1, alpha=None, loop=False, cache=False):
        assert patch_size % 2 == 1, 'Only support odd patch size'
        assert stride == 1, 'Only support stride of 1'
        self.patch_size = patch_size
        self.stride = stride
        self.alpha = alpha
        self.loop = loop
        self.cache = cache
        self.cached_data = None

    def __call__(self, X, Ys):
        assert X.shape[0] == 1, 'Only support batch size of 1 for X'
        # TODO(synk): loop=True (circular padding before unfold) not implemented.
        x_patches = extract_patches(X, self.patch_size, self.stride)
        if not self.cache or self.cached_data is None:
            y_patches = jnp.concatenate(
                [extract_patches(y, self.patch_size, self.stride) for y in Ys], axis=0)
            self.cached_data = y_patches
        else:
            y_patches = self.cached_data
        # TODO(synk): alpha-based per-column normalization (get_col_mins_efficient)
        # not implemented; default alpha=None path only.
        assert self.alpha is None
        dists = min_nn_dists(x_patches, y_patches)
        return dists.mean()

    def clean_cache(self):
        self.cached_data = None


def _reference_loss(X, Ys, patch_size):
    """Pure-JAX f32 reference matching the PyTorch forward (alpha=None)."""
    xp = extract_patches(X, patch_size)
    yp = jnp.concatenate([extract_patches(y, patch_size) for y in Ys], axis=0)
    d = xp.shape[1]
    dist = (jnp.sum(xp * xp, 1)[:, None] + jnp.sum(yp * yp, 1)[None, :]
            - 2.0 * xp @ yp.T) / d
    return dist.min(axis=1).mean()


if __name__ == "__main__":
    key = jax.random.PRNGKey(0)
    k1, k2, k3 = jax.random.split(key, 3)

    # Small shapes consistent with the module: batch=1 X, a list of target images Ys.
    X = jax.random.normal(k1, (1, 3, 16, 16), dtype=jnp.float32)
    Ys = [
        jax.random.normal(k2, (1, 3, 16, 16), dtype=jnp.float32),
        jax.random.normal(k3, (1, 3, 12, 12), dtype=jnp.float32),
    ]

    loss_mod = PatchCoherentLoss(patch_size=7, stride=1, alpha=None)
    loss = loss_mod(X, Ys)
    loss = jax.block_until_ready(loss)

    ref = jax.block_until_ready(_reference_loss(X, Ys, 7))
    # bf16 cross-term on the MXU (norms in f32) -> slightly looser tolerance vs f32 ref.
    assert jnp.allclose(loss, ref, rtol=5e-3, atol=5e-3), (loss, ref)

    print("KERNEL_OK")
</pallas_src>

<mosaic_0001>
module attributes {stable_mosaic.version = 11 : i64} {
  func.func @_min_dist_kernel(%arg0: i32, %arg1: i32, %arg2: memref<128x256xbf16, #tpu.memory_space<vmem>>, %arg3: memref<256x256xbf16, #tpu.memory_space<vmem>>, %arg4: memref<1x256xf32, #tpu.memory_space<vmem>>, %arg5: memref<128x1xf32, #tpu.memory_space<vmem>>, %arg6: memref<128x256xf32, #tpu.memory_space<vmem>>) attributes {dimension_semantics = [#tpu.dimension_semantics<parallel>, #tpu.dimension_semantics<arbitrary>], iteration_bounds = array<i64: 1, 1>, scalar_prefetch = 0 : i64, scratch_operands = 1 : i64, tpu.core_type = #tpu.core_type<tc>, window_params = [{transform_indices = @transform_0, window_bounds = array<i64: 128, 256>}, {transform_indices = @transform_1, window_bounds = array<i64: 256, 256>}, {transform_indices = @transform_2, window_bounds = array<i64: 1, 256>}, {transform_indices = @transform_3, window_bounds = array<i64: 128, 1>}]} {
    %c0_i32 = arith.constant 0 : i32
    %0 = arith.cmpi eq, %arg1, %c0_i32 : i32
    %1 = arith.extui %0 : i1 to i32
    %c0_i32_0 = arith.constant 0 : i32
    %2 = arith.cmpi ne, %1, %c0_i32_0 : i32
    scf.if %2 {
      %cst_13 = arith.constant 0x7F800000 : f32
      %17 = vector.broadcast %cst_13 : f32 to vector<128x256xf32>
      %c0_14 = arith.constant 0 : index
      %c0_15 = arith.constant 0 : index
      %18 = vector.load %arg6[%c0_14, %c0_15] : memref<128x256xf32, #tpu.memory_space<vmem>>, vector<128x256xf32>
      tpu.vector_store %arg6[%c0_14, %c0_15], %17 {strides = array<i32>} : memref<128x256xf32, #tpu.memory_space<vmem>>, vector<128x256xf32>,
    } else {
    }
    %c0 = arith.constant 0 : index
    %c0_1 = arith.constant 0 : index
    %3 = vector.load %arg2[%c0, %c0_1] : memref<128x256xbf16, #tpu.memory_space<vmem>>, vector<128x256xbf16>
    %c0_2 = arith.constant 0 : index
    %c0_3 = arith.constant 0 : index
    %4 = vector.load %arg3[%c0_2, %c0_3] : memref<256x256xbf16, #tpu.memory_space<vmem>>, vector<256x256xbf16>
    %cst = arith.constant dense<0.000000e+00> : vector<128x256xf32>
    %5 = tpu.matmul %3, %4, %cst {dimension_numbers = #tpu.dot_dimension_numbers<[1], [1], [0], [0], [0, 0, 1, 0], [], []>} : vector<128x256xbf16>, vector<256x256xbf16>, vector<128x256xf32> -> vector<128x256xf32>
    %c0_4 = arith.constant 0 : index
    %c0_5 = arith.constant 0 : index
    %6 = vector.load %arg4[%c0_4, %c0_5] : memref<1x256xf32, #tpu.memory_space<vmem>>, vector<1x256xf32>
    %cst_6 = arith.constant 2.000000e+00 : f32
    %7 = vector.broadcast %cst_6 : f32 to vector<128x256xf32>
    %8 = arith.mulf %7, %5 : vector<128x256xf32>
    %9 = vector.broadcast %6 : vector<1x256xf32> to vector<128x256xf32>
    %10 = arith.subf %9, %8 : vector<128x256xf32>
    %c0_7 = arith.constant 0 : index
    %c0_8 = arith.constant 0 : index
    %11 = vector.load %arg6[%c0_7, %c0_8] : memref<128x256xf32, #tpu.memory_space<vmem>>, vector<128x256xf32>
    %12 = arith.minimumf %11, %10 : vector<128x256xf32>
    %c0_9 = arith.constant 0 : index
    %c0_10 = arith.constant 0 : index
    %13 = vector.load %arg6[%c0_9, %c0_10] : memref<128x256xf32, #tpu.memory_space<vmem>>, vector<128x256xf32>
    tpu.vector_store %arg6[%c0_9, %c0_10], %12 {strides = array<i32>} : memref<128x256xf32, #tpu.memory_space<vmem>>, vector<128x256xf32>,
    %c0_i32_11 = arith.constant 0 : i32
    %14 = arith.cmpi eq, %arg1, %c0_i32_11 : i32
    %15 = arith.extui %14 : i1 to i32
    %c0_i32_12 = arith.constant 0 : i32
    %16 = arith.cmpi ne, %15, %c0_i32_12 : i32
    scf.if %16 {
      %c0_13 = arith.constant 0 : index
      %c0_14 = arith.constant 0 : index
      %17 = vector.load %arg6[%c0_13, %c0_14] : memref<128x256xf32, #tpu.memory_space<vmem>>, vector<128x256xf32>
      %cst_15 = arith.constant dense<0x7F800000> : vector<128xf32>
      %18 = vector.multi_reduction <minimumf>, %17, %cst_15 [1] : vector<128x256xf32> to vector<128xf32>
      %19 = vector.shape_cast %18 : vector<128xf32> to vector<128x1xf32>
      %c0_16 = arith.constant 0 : index
      %c0_17 = arith.constant 0 : index
      %20 = vector.load %arg5[%c0_16, %c0_17] : memref<128x1xf32, #tpu.memory_space<vmem>>, vector<128x1xf32>
      tpu.vector_store %arg5[%c0_16, %c0_17], %19 {strides = array<i32>} : memref<128x1xf32, #tpu.memory_space<vmem>>, vector<128x1xf32>,
    } else {
    }
    return
  }
  func.func @transform_0(%arg0: i32, %arg1: i32) -> (i32, i32) {
    %c0_i32 = arith.constant 0 : i32
    %c0_i32_0 = arith.constant 0 : i32
    return %arg0, %c0_i32 : i32, i32
  }
  func.func @transform_1(%arg0: i32, %arg1: i32) -> (i32, i32) {
    %c0_i32 = arith.constant 0 : i32
    %c0_i32_0 = arith.constant 0 : i32
    return %arg1, %c0_i32 : i32, i32
  }
  func.func @transform_2(%arg0: i32, %arg1: i32) -> (i32, i32) {
    %c0_i32 = arith.constant 0 : i32
    %c0_i32_0 = arith.constant 0 : i32
    return %c0_i32, %arg1 : i32, i32
  }
  func.func @transform_3(%arg0: i32, %arg1: i32) -> (i32, i32) {
    %c0_i32 = arith.constant 0 : i32
    %c0_i32_0 = arith.constant 0 : i32
    return %arg0, %c0_i32 : i32, i32
  }
}

</mosaic_0001>

<llo_original>
// kernel: tpu_custom_call.1
$region0: #{tpu_custom_call.1}
  #allocation0 [shape = 'u32[]', space=smem, size = 0x4, offset = 0x4, fixed_abs, tag = 'smem constant byte address 0x4 - core index']
  #allocation1 [shape = 'u32[72,128]{1,0:T(1,128)}', space=vmem, size = 0x9000, scoped, tag = 'internal scratch']
  #allocation2 [shape = 'f32[128,256]{1,0:T(8,128)}', space=vmem, size = 0x20000, scoped, tag = 'scratch operand']
  %s0 = inlined_call_operand.hbm [shape: bf16[128,256], index: 0, kind: input, shape index: {}]
  %s1 = inlined_call_operand.hbm [shape: bf16[256,256], index: 1, kind: input, shape index: {}]
  %s2 = inlined_call_operand.hbm [shape: f32[1,256], index: 2, kind: input, shape index: {}]
  %s3 = inlined_call_operand.vmem [shape: f32[128,1], index: 3, kind: output, shape index: {}]
  %s4 = sld [smem:[#allocation0]]
  $region42: #{tpu_custom_call.1} parent=0
    _
  %s6 = ssub.s32 1, %s4
  %s7 = scalar_select 0, %s6, %s4
  $region1: #{tpu_custom_call.1} parent=0
    #allocation3 [shape = 'u8[65536]{0}', space=vmem, size = 0x10000, scoped, tag = 'input window, operand 0, single buffered']
    #allocation4 [shape = 's32[1]{0}', space=sflag, size = 0x4, scoped, tag = 'scoped memory for tpu_custom_call.1']
    #allocation5 [shape = 'u8[131072]{0}', space=vmem, size = 0x20000, scoped, tag = 'input window, operand 1, single buffered']
    #allocation6 [shape = 's32[1]{0}', space=sflag, size = 0x4, scoped, tag = 'scoped memory for tpu_custom_call.1']
    #allocation7 [shape = 'u8[1024]{0}', space=vmem, size = 0x400, scoped, tag = 'input window, operand 2, single buffered']
    %8 = vsyncpa [#allocation4], 0
    %9 = vsyncpa [#allocation6], 0
    // Predicated region
    $region2: #{tpu_custom_call.1} parent=1 // pred_check
      _
    $region3: #{tpu_custom_call.1} parent=1 // pred_check_branch
      %11 = sbr.rel (0) target = $region5
    $region4: #{tpu_custom_call.1} parent=1 // pred_region
      %13 = vsyncadd [#allocation4], 0
      %s14 = sshll.u32 %s0, 4
      %s15 = int_to_ptr.hbm [resolvable:$true] %s14
      %s16 = sshll.u32 [#allocation3], 4
      %s17 = int_to_ptr.vmem [resolvable:$true] %s16
      %22 = dma.hbm_to_vmem [thread:$0]  %s15, 2048, %s17, [#allocation4], 128, 128, 8
    $region5: #{tpu_custom_call.1} parent=1 // pred_fallthru
      _
    // Predicated region
    $region6: #{tpu_custom_call.1} parent=1 // pred_check
      _
    $region7: #{tpu_custom_call.1} parent=1 // pred_check_branch
      %24 = sbr.rel (0) target = $region9
    $region8: #{tpu_custom_call.1} parent=1 // pred_region
      %26 = vsyncadd [#allocation6], 0
      %s27 = sshll.u32 %s1, 4
      %s28 = int_to_ptr.hbm [resolvable:$true] %s27
      %s29 = sshll.u32 [#allocation5], 4
      %s30 = int_to_ptr.vmem [resolvable:$true] %s29
      %35 = dma.hbm_to_vmem [thread:$0]  %s28, 4096, %s30, [#allocation6], 128, 128, 8
    $region9: #{tpu_custom_call.1} parent=1 // pred_fallthru
      _
    // Predicated region
    $region10: #{tpu_custom_call.1} parent=1 // pred_check
      _
    $region11: #{tpu_custom_call.1} parent=1 // pred_check_branch
      %37 = sbr.rel (0) target = $region13
    $region12: #{tpu_custom_call.1} parent=1 // pred_region
      %39 = vsyncadd [#allocation6], 0
      %s41 = sshll.u32 %s2, 4
      %s42 = int_to_ptr.hbm [resolvable:$true] %s41
      %s43 = sshll.u32 [#allocation7], 4
      %s44 = int_to_ptr.vmem [resolvable:$true] %s43
      %46 = dma.hbm_to_vmem [thread:$0]  %s42, 32, %s44, [#allocation6]
    $region13: #{tpu_custom_call.1} parent=1 // pred_fallthru
      _
    // Predicated region
    $region14: #{tpu_custom_call.1} parent=1 // pred_check
      _
    $region15: #{tpu_custom_call.1} parent=1 // pred_check_branch
      %48 = sbr.rel (0) target = $region17
    $region16: #{tpu_custom_call.1} parent=1 // pred_region
      %50 = dma.done [#allocation4], 2048
    $region17: #{tpu_custom_call.1} parent=1 // pred_fallthru
      _
    // Predicated region
    $region18: #{tpu_custom_call.1} parent=1 // pred_check
      _
    $region19: #{tpu_custom_call.1} parent=1 // pred_check_branch
      %52 = sbr.rel (0) target = $region21
    $region20: #{tpu_custom_call.1} parent=1 // pred_region
      %54 = dma.done [#allocation6], 4096
    $region21: #{tpu_custom_call.1} parent=1 // pred_fallthru
      _
    // Predicated region
    $region22: #{tpu_custom_call.1} parent=1 // pred_check
      _
    $region23: #{tpu_custom_call.1} parent=1 // pred_check_branch
      %56 = sbr.rel (0) target = $region25
    $region24: #{tpu_custom_call.1} parent=1 // pred_region
      %58 = dma.done [#allocation6], 32
    $region25: #{tpu_custom_call.1} parent=1 // pred_fallthru
      _
    %p59 = scmp.eq.s32.totalorder 0, 0
    // Predicated region
    $region26: #{tpu_custom_call.1} parent=1 // pred_check
      %p60 = pneg %p59
    $region27: #{tpu_custom_call.1} parent=1 // pred_check_branch
      %62 = sbr.rel (%p60) target = $region29
    $region28: #{tpu_custom_call.1} parent=1 // pred_region
      %63 = vst [vmem:[#allocation2] sm:$0xff] inf
      %64 = vst [vmem:[#allocation2 + $0x8] sm:$0xff] inf
      %65 = vst [vmem:[#allocation2 + $0x10] sm:$0xff] inf
      %66 = vst [vmem:[#allocation2 + $0x18] sm:$0xff] inf
      %67 = vst [vmem:[#allocation2 + $0x20] sm:$0xff] inf
      %68 = vst [vmem:[#allocation2 + $0x28] sm:$0xff] inf
      %69 = vst [vmem:[#allocation2 + $0x30] sm:$0xff] inf
      %70 = vst [vmem:[#allocation2 + $0x38] sm:$0xff] inf
      %71 = vst [vmem:[#allocation2 + $0x40] sm:$0xff] inf
      %72 = vst [vmem:[#allocation2 + $0x48] sm:$0xff] inf
      %73 = vst [vmem:[#allocation2 + $0x50] sm:$0xff] inf
      %74 = vst [vmem:[#allocation2 + $0x58] sm:$0xff] inf
      %75 = vst [vmem:[#allocation2 + $0x60] sm:$0xff] inf
      %76 = vst [vmem:[#allocation2 + $0x68] sm:$0xff] inf
      %77 = vst [vmem:[#allocation2 + $0x70] sm:$0xff] inf
      %78 = vst [vmem:[#allocation2 + $0x78] sm:$0xff] inf
      %79 = vst [vmem:[#allocation2 + $0x80] sm:$0xff] inf
      %80 = vst [vmem:[#allocation2 + $0x88] sm:$0xff] inf
      %81 = vst [vmem:[#allocation2 + $0x90] sm:$0xff] inf
      %82 = vst [vmem:[#allocation2 + $0x98] sm:$0xff] inf
      %83 = vst [vmem:[#allocation2 + $0xa0] sm:$0xff] inf
      %84 = vst [vmem:[#allocation2 + $0xa8] sm:$0xff] inf
      %85 = vst [vmem:[#allocation2 + $0xb0] sm:$0xff] inf
      %86 = vst [vmem:[#allocation2 + $0xb8] sm:$0xff] inf
      %87 = vst [vmem:[#allocation2 + $0xc0] sm:$0xff] inf
      %88 = vst [vmem:[#allocation2 + $0xc8] sm:$0xff] inf
      %89 = vst [vmem:[#allocation2 + $0xd0] sm:$0xff] inf
      %90 = vst [vmem:[#allocation2 + $0xd8] sm:$0xff] inf
      %91 = vst [vmem:[#allocation2 + $0xe0] sm:$0xff] inf
      %92 = vst [vmem:[#allocation2 + $0xe8] sm:$0xff] inf
      %93 = vst [vmem:[#allocation2 + $0xf0] sm:$0xff] inf
      %94 = vst [vmem:[#allocation2 + $0xf8] sm:$0xff] inf
    $region29: #{tpu_custom_call.1} parent=1 // pred_fallthru
      _
    %v95 = vld [vmem:[#allocation3] sm:$0xff]
    %v96 = vld [vmem:[#allocation3 + $0x8] sm:$0xff]
    %v97 = vld [vmem:[#allocation3 + $0x10] sm:$0xff]
    %v98 = vld [vmem:[#allocation3 + $0x18] sm:$0xff]
    %v99 = vld [vmem:[#allocation3 + $0x20] sm:$0xff]
    %v100 = vld [vmem:[#allocation3 + $0x28] sm:$0xff]
    %v101 = vld [vmem:[#allocation3 + $0x30] sm:$0xff]
    %v102 = vld [vmem:[#allocation3 + $0x38] sm:$0xff]
    %v103 = vld [vmem:[#allocation3 + $0x40] sm:$0xff]
    %v104 = vld [vmem:[#allocation3 + $0x48] sm:$0xff]
    %v105 = vld [vmem:[#allocation3 + $0x50] sm:$0xff]
    %v106 = vld [vmem:[#allocation3 + $0x58] sm:$0xff]
    %v107 = vld [vmem:[#allocation3 + $0x60] sm:$0xff]
    %v108 = vld [vmem:[#allocation3 + $0x68] sm:$0xff]
    %v109 = vld [vmem:[#allocation3 + $0x70] sm:$0xff]
    %v110 = vld [vmem:[#allocation3 + $0x78] sm:$0xff]
    %v111 = vld [vmem:[#allocation5] sm:$0xff]
    %v112 = vld [vmem:[#allocation5 + $0x8] sm:$0xff]
    %v113 = vld [vmem:[#allocation5 + $0x10] sm:$0xff]
    %v114 = vld [vmem:[#allocation5 + $0x18] sm:$0xff]
    %v115 = vld [vmem:[#allocation5 + $0x20] sm:$0xff]
    %v116 = vld [vmem:[#allocation5 + $0x28] sm:$0xff]
    %v117 = vld [vmem:[#allocation5 + $0x30] sm:$0xff]
    %v118 = vld [vmem:[#allocation5 + $0x38] sm:$0xff]
    %v119 = vld [vmem:[#allocation5 + $0x40] sm:$0xff]
    %v120 = vld [vmem:[#allocation5 + $0x48] sm:$0xff]
    %v121 = vld [vmem:[#allocation5 + $0x50] sm:$0xff]
    %v122 = vld [vmem:[#allocation5 + $0x58] sm:$0xff]
    %v123 = vld [vmem:[#allocation5 + $0x60] sm:$0xff]
    %v124 = vld [vmem:[#allocation5 + $0x68] sm:$0xff]
    %v125 = vld [vmem:[#allocation5 + $0x70] sm:$0xff]
    %v126 = vld [vmem:[#allocation5 + $0x78] sm:$0xff]
    %v127 = vld [vmem:[#allocation5 + $0x80] sm:$0xff]
    %v128 = vld [vmem:[#allocation5 + $0x88] sm:$0xff]
    %v129 = vld [vmem:[#allocation5 + $0x90] sm:$0xff]
    %v130 = vld [vmem:[#allocation5 + $0x98] sm:$0xff]
    %v131 = vld [vmem:[#allocation5 + $0xa0] sm:$0xff]
    %v132 = vld [vmem:[#allocation5 + $0xa8] sm:$0xff]
    %v133 = vld [vmem:[#allocation5 + $0xb0] sm:$0xff]
    %v134 = vld [vmem:[#allocation5 + $0xb8] sm:$0xff]
    %v135 = vld [vmem:[#allocation5 + $0xc0] sm:$0xff]
    %v136 = vld [vmem:[#allocation5 + $0xc8] sm:$0xff]
    %v137 = vld [vmem:[#allocation5 + $0xd0] sm:$0xff]
    %v138 = vld [vmem:[#allocation5 + $0xd8] sm:$0xff]
    %v139 = vld [vmem:[#allocation5 + $0xe0] sm:$0xff]
    %v140 = vld [vmem:[#allocation5 + $0xe8] sm:$0xff]
    %v141 = vld [vmem:[#allocation5 + $0xf0] sm:$0xff]
    %v142 = vld [vmem:[#allocation5 + $0xf8] sm:$0xff]
    %v159 = vunpack.c.l.b16 %v95
    %v160 = vunpack.c.h.b16 %v95
    %v161 = vunpack.c.l.b16 %v96
    %v162 = vunpack.c.h.b16 %v96
    %v163 = vunpack.c.l.b16 %v97
    %v164 = vunpack.c.h.b16 %v97
    %v165 = vunpack.c.l.b16 %v98
    %v166 = vunpack.c.h.b16 %v98
    %v167 = vunpack.c.l.b16 %v99
    %v168 = vunpack.c.h.b16 %v99
    %v169 = vunpack.c.l.b16 %v100
    %v170 = vunpack.c.h.b16 %v100
    %v171 = vunpack.c.l.b16 %v101
    %v172 = vunpack.c.h.b16 %v101
    %v173 = vunpack.c.l.b16 %v102
    %v174 = vunpack.c.h.b16 %v102
    %v175 = vunpack.c.l.b16 %v103
    %v176 = vunpack.c.h.b16 %v103
    %v177 = vunpack.c.l.b16 %v104
    %v178 = vunpack.c.h.b16 %v104
    %v179 = vunpack.c.l.b16 %v105
    %v180 = vunpack.c.h.b16 %v105
    %v181 = vunpack.c.l.b16 %v106
    %v182 = vunpack.c.h.b16 %v106
    %v183 = vunpack.c.l.b16 %v107
    %v184 = vunpack.c.h.b16 %v107
    %v185 = vunpack.c.l.b16 %v108
    %v186 = vunpack.c.h.b16 %v108
    %v187 = vunpack.c.l.b16 %v109
    %v188 = vunpack.c.h.b16 %v109
    %v189 = vunpack.c.l.b16 %v110
    %v190 = vunpack.c.h.b16 %v110
    %v191 = vpack.c.b16 %v161, %v159
    %v192 = vpack.c.b16 %v162, %v160
    %v193 = vpack.c.b16 %v165, %v163
    %v194 = vpack.c.b16 %v166, %v164
    %v195 = vpack.c.b16 %v169, %v167
    %v196 = vpack.c.b16 %v170, %v168
    %v197 = vpack.c.b16 %v173, %v171
    %v198 = vpack.c.b16 %v174, %v172
    %v199 = vpack.c.b16 %v177, %v175
    %v200 = vpack.c.b16 %v178, %v176
    %v201 = vpack.c.b16 %v181, %v179
    %v202 = vpack.c.b16 %v182, %v180
    %v203 = vpack.c.b16 %v185, %v183
    %v204 = vpack.c.b16 %v186, %v184
    %v205 = vpack.c.b16 %v189, %v187
    %v206 = vpack.c.b16 %v190, %v188
    %v255 = vunpack.c.l.b16 %v111
    %v256 = vunpack.c.h.b16 %v111
    %v257 = vunpack.c.l.b16 %v112
    %v258 = vunpack.c.h.b16 %v112
    %v259 = vunpack.c.l.b16 %v113
    %v260 = vunpack.c.h.b16 %v113
    %v261 = vunpack.c.l.b16 %v114
    %v262 = vunpack.c.h.b16 %v114
    %v263 = vunpack.c.l.b16 %v115
    %v264 = vunpack.c.h.b16 %v115
    %v265 = vunpack.c.l.b16 %v116
    %v266 = vunpack.c.h.b16 %v116
    %v267 = vunpack.c.l.b16 %v117
    %v268 = vunpack.c.h.b16 %v117
    %v269 = vunpack.c.l.b16 %v118
    %v270 = vunpack.c.h.b16 %v118
    %v271 = vunpack.c.l.b16 %v119
    %v272 = vunpack.c.h.b16 %v119
    %v273 = vunpack.c.l.b16 %v120
    %v274 = vunpack.c.h.b16 %v120
    %v275 = vunpack.c.l.b16 %v121
    %v276 = vunpack.c.h.b16 %v121
    %v277 = vunpack.c.l.b16 %v122
    %v278 = vunpack.c.h.b16 %v122
    %v279 = vunpack.c.l.b16 %v123
    %v280 = vunpack.c.h.b16 %v123
    %v281 = vunpack.c.l.b16 %v124
    %v282 = vunpack.c.h.b16 %v124
    %v283 = vunpack.c.l.b16 %v125
    %v284 = vunpack.c.h.b16 %v125
    %v285 = vunpack.c.l.b16 %v126
    %v286 = vunpack.c.h.b16 %v126
    %v287 = vunpack.c.l.b16 %v127
    %v288 = vunpack.c.h.b16 %v127
    %v289 = vunpack.c.l.b16 %v128
    %v290 = vunpack.c.h.b16 %v128
    %v291 = vunpack.c.l.b16 %v129
    %v292 = vunpack.c.h.b16 %v129
    %v293 = vunpack.c.l.b16 %v130
    %v294 = vunpack.c.h.b16 %v130
    %v295 = vunpack.c.l.b16 %v131
    %v296 = vunpack.c.h.b16 %v131
    %v297 = vunpack.c.l.b16 %v132
    %v298 = vunpack.c.h.b16 %v132
    %v299 = vunpack.c.l.b16 %v133
    %v300 = vunpack.c.h.b16 %v133
    %v301 = vunpack.c.l.b16 %v134
    %v302 = vunpack.c.h.b16 %v134
    %v303 = vunpack.c.l.b16 %v135
    %v304 = vunpack.c.h.b16 %v135
    %v305 = vunpack.c.l.b16 %v136
    %v306 = vunpack.c.h.b16 %v136
    %v307 = vunpack.c.l.b16 %v137
    %v308 = vunpack.c.h.b16 %v137
    %v309 = vunpack.c.l.b16 %v138
    %v310 = vunpack.c.h.b16 %v138
    %v311 = vunpack.c.l.b16 %v139
    %v312 = vunpack.c.h.b16 %v139
    %v313 = vunpack.c.l.b16 %v140
    %v314 = vunpack.c.h.b16 %v140
    %v315 = vunpack.c.l.b16 %v141
    %v316 = vunpack.c.h.b16 %v141
    %v317 = vunpack.c.l.b16 %v142
    %v318 = vunpack.c.h.b16 %v142
    %v319 = vpack.c.b16 %v257, %v255
    %v320 = vpack.c.b16 %v258, %v256
    %v321 = vpack.c.b16 %v261, %v259
    %v322 = vpack.c.b16 %v262, %v260
    %v323 = vpack.c.b16 %v265, %v263
    %v324 = vpack.c.b16 %v266, %v264
    %v325 = vpack.c.b16 %v269, %v267
    %v326 = vpack.c.b16 %v270, %v268
    %v327 = vpack.c.b16 %v273, %v271
    %v328 = vpack.c.b16 %v274, %v272
    %v329 = vpack.c.b16 %v277, %v275
    %v330 = vpack.c.b16 %v278, %v276
    %v331 = vpack.c.b16 %v281, %v279
    %v332 = vpack.c.b16 %v282, %v280
    %v333 = vpack.c.b16 %v285, %v283
    %v334 = vpack.c.b16 %v286, %v284
    %v335 = vpack.c.b16 %v289, %v287
    %v336 = vpack.c.b16 %v290, %v288
    %v337 = vpack.c.b16 %v293, %v291
    %v338 = vpack.c.b16 %v294, %v292
    %v339 = vpack.c.b16 %v297, %v295
    %v340 = vpack.c.b16 %v298, %v296
    %v341 = vpack.c.b16 %v301, %v299
    %v342 = vpack.c.b16 %v302, %v300
    %v343 = vpack.c.b16 %v305, %v303
    %v344 = vpack.c.b16 %v306, %v304
    %v345 = vpack.c.b16 %v309, %v307
    %v346 = vpack.c.b16 %v310, %v308
    %v347 = vpack.c.b16 %v313, %v311
    %v348 = vpack.c.b16 %v314, %v312
    %v349 = vpack.c.b16 %v317, %v315
    %v350 = vpack.c.b16 %v318, %v316
    %383 = vmatpush.bf16.xpose.msra.mxu0 %v333
    %384 = vmatpush.bf16.xpose.msra.mxu0 %v331
    %385 = vmatpush.bf16.xpose.msra.mxu0 %v329
    %386 = vmatpush.bf16.xpose.msra.mxu0 %v327
    %387 = vmatpush.bf16.xpose.msra.mxu0 %v325
    %388 = vmatpush.bf16.xpose.msra.mxu0 %v323
    %389 = vmatpush.bf16.xpose.msra.mxu0 %v321
    %390 = vmatpush.bf16.xpose.msra.mxu0 %v319
    %391 = vmatmul.bf16.gmra.mxu0 %v191
    %v392 = vpop.f32.mrf.mxu0
    %v393 = vadd.f32 0.0, %v392
    %v394 = vpop.f32.mrf.mxu0
    %v395 = vadd.f32 0.0, %v394
    %396 = vmatmul.bf16.gmra.mxu0 %v193
    %v397 = vpop.f32.mrf.mxu0
    %v398 = vadd.f32 0.0, %v397
    %v399 = vpop.f32.mrf.mxu0
    %v400 = vadd.f32 0.0, %v399
    %401 = vmatmul.bf16.gmra.mxu0 %v195
    %v402 = vpop.f32.mrf.mxu0
    %v403 = vadd.f32 0.0, %v402
    %v404 = vpop.f32.mrf.mxu0
    %v405 = vadd.f32 0.0, %v404
    %406 = vmatmul.bf16.gmra.mxu0 %v197
    %v407 = vpop.f32.mrf.mxu0
    %v408 = vadd.f32 0.0, %v407
    %v409 = vpop.f32.mrf.mxu0
    %v410 = vadd.f32 0.0, %v409
    %411 = vmatmul.bf16.gmra.mxu0 %v199
    %v412 = vpop.f32.mrf.mxu0
    %v413 = vadd.f32 0.0, %v412
    %v414 = vpop.f32.mrf.mxu0
    %v415 = vadd.f32 0.0, %v414
    %416 = vmatmul.bf16.gmra.mxu0 %v201
    %v417 = vpop.f32.mrf.mxu0
    %v418 = vadd.f32 0.0, %v417
    %v419 = vpop.f32.mrf.mxu0
    %v420 = vadd.f32 0.0, %v419
    %421 = vmatmul.bf16.gmra.mxu0 %v203
    %v422 = vpop.f32.mrf.mxu0
    %v423 = vadd.f32 0.0, %v422
    %v424 = vpop.f32.mrf.mxu0
    %v425 = vadd.f32 0.0, %v424
    %426 = vmatmul.bf16.gmra.mxu0 %v205
    %v427 = vpop.f32.mrf.mxu0
    %v428 = vadd.f32 0.0, %v427
    %v429 = vpop.f32.mrf.mxu0
    %v430 = vadd.f32 0.0, %v429
    %431 = vdwg.mxu0
    %432 = vmatpush.bf16.xpose.msra.mxu0 %v334
    %433 = vmatpush.bf16.xpose.msra.mxu0 %v332
    %434 = vmatpush.bf16.xpose.msra.mxu0 %v330
    %435 = vmatpush.bf16.xpose.msra.mxu0 %v328
    %436 = vmatpush.bf16.xpose.msra.mxu0 %v326
    %437 = vmatpush.bf16.xpose.msra.mxu0 %v324
    %438 = vmatpush.bf16.xpose.msra.mxu0 %v322
    %439 = vmatpush.bf16.xpose.msra.mxu0 %v320
    %440 = vmatmul.bf16.gmra.mxu0 %v192
    %v441 = vpop.f32.mrf.mxu0
    %v442 = vadd.f32 %v393, %v441
    %v443 = vpop.f32.mrf.mxu0
    %v444 = vadd.f32 %v395, %v443
    %445 = vmatmul.bf16.gmra.mxu0 %v194
    %v446 = vpop.f32.mrf.mxu0
    %v447 = vadd.f32 %v398, %v446
    %v448 = vpop.f32.mrf.mxu0
    %v449 = vadd.f32 %v400, %v448
    %450 = vmatmul.bf16.gmra.mxu0 %v196
    %v451 = vpop.f32.mrf.mxu0
    %v452 = vadd.f32 %v403, %v451
    %v453 = vpop.f32.mrf.mxu0
    %v454 = vadd.f32 %v405, %v453
    %455 = vmatmul.bf16.gmra.mxu0 %v198
    %v456 = vpop.f32.mrf.mxu0
    %v457 = vadd.f32 %v408, %v456
    %v458 = vpop.f32.mrf.mxu0
    %v459 = vadd.f32 %v410, %v458
    %460 = vmatmul.bf16.gmra.mxu0 %v200
    %v461 = vpop.f32.mrf.mxu0
    %v462 = vadd.f32 %v413, %v461
    %v463 = vpop.f32.mrf.mxu0
    %v464 = vadd.f32 %v415, %v463
    %465 = vmatmul.bf16.gmra.mxu0 %v202
    %v466 = vpop.f32.mrf.mxu0
    %v467 = vadd.f32 %v418, %v466
    %v468 = vpop.f32.mrf.mxu0
    %v469 = vadd.f32 %v420, %v468
    %470 = vmatmul.bf16.gmra.mxu0 %v204
    %v471 = vpop.f32.mrf.mxu0
    %v472 = vadd.f32 %v423, %v471
    %v473 = vpop.f32.mrf.mxu0
    %v474 = vadd.f32 %v425, %v473
    %475 = vmatmul.bf16.gmra.mxu0 %v206
    %v476 = vpop.f32.mrf.mxu0
    %v477 = vadd.f32 %v428, %v476
    %v478 = vpop.f32.mrf.mxu0
    %v479 = vadd.f32 %v430, %v478
    %480 = vdwg.mxu0
    %481 = vmatpush.bf16.xpose.msra.mxu0 %v349
    %482 = vmatpush.bf16.xpose.msra.mxu0 %v347
    %483 = vmatpush.bf16.xpose.msra.mxu0 %v345
    %484 = vmatpush.bf16.xpose.msra.mxu0 %v343
    %485 = vmatpush.bf16.xpose.msra.mxu0 %v341
    %486 = vmatpush.bf16.xpose.msra.mxu0 %v339
    %487 = vmatpush.bf16.xpose.msra.mxu0 %v337
    %488 = vmatpush.bf16.xpose.msra.mxu0 %v335
    %489 = vmatmul.bf16.gmra.mxu0 %v191
    %v490 = vpop.f32.mrf.mxu0
    %v491 = vadd.f32 0.0, %v490
    %v492 = vpop.f32.mrf.mxu0
    %v493 = vadd.f32 0.0, %v492
    %494 = vmatmul.bf16.gmra.mxu0 %v193
    %v495 = vpop.f32.mrf.mxu0
    %v496 = vadd.f32 0.0, %v495
    %v497 = vpop.f32.mrf.mxu0
    %v498 = vadd.f32 0.0, %v497
    %499 = vmatmul.bf16.gmra.mxu0 %v195
    %v500 = vpop.f32.mrf.mxu0
    %v501 = vadd.f32 0.0, %v500
    %v502 = vpop.f32.mrf.mxu0
    %v503 = vadd.f32 0.0, %v502
    %504 = vmatmul.bf16.gmra.mxu0 %v197
    %v505 = vpop.f32.mrf.mxu0
    %v506 = vadd.f32 0.0, %v505
    %v507 = vpop.f32.mrf.mxu0
    %v508 = vadd.f32 0.0, %v507
    %509 = vmatmul.bf16.gmra.mxu0 %v199
    %v510 = vpop.f32.mrf.mxu0
    %v511 = vadd.f32 0.0, %v510
    %v512 = vpop.f32.mrf.mxu0
    %v513 = vadd.f32 0.0, %v512
    %514 = vmatmul.bf16.gmra.mxu0 %v201
    %v515 = vpop.f32.mrf.mxu0
    %v516 = vadd.f32 0.0, %v515
    %v517 = vpop.f32.mrf.mxu0
    %v518 = vadd.f32 0.0, %v517
    %519 = vmatmul.bf16.gmra.mxu0 %v203
    %v520 = vpop.f32.mrf.mxu0
    %v521 = vadd.f32 0.0, %v520
    %v522 = vpop.f32.mrf.mxu0
    %v523 = vadd.f32 0.0, %v522
    %524 = vmatmul.bf16.gmra.mxu0 %v205
    %v525 = vpop.f32.mrf.mxu0
    %v526 = vadd.f32 0.0, %v525
    %v527 = vpop.f32.mrf.mxu0
    %v528 = vadd.f32 0.0, %v527
    %529 = vdwg.mxu0
    %530 = vmatpush.bf16.xpose.msra.mxu0 %v350
    %531 = vmatpush.bf16.xpose.msra.mxu0 %v348
    %532 = vmatpush.bf16.xpose.msra.mxu0 %v346
    %533 = vmatpush.bf16.xpose.msra.mxu0 %v344
    %534 = vmatpush.bf16.xpose.msra.mxu0 %v342
    %535 = vmatpush.bf16.xpose.msra.mxu0 %v340
    %536 = vmatpush.bf16.xpose.msra.mxu0 %v338
    %537 = vmatpush.bf16.xpose.msra.mxu0 %v336
    %538 = vmatmul.bf16.gmra.mxu0 %v192
    %v539 = vpop.f32.mrf.mxu0
    %v540 = vadd.f32 %v491, %v539
    %v541 = vpop.f32.mrf.mxu0
    %v542 = vadd.f32 %v493, %v541
    %543 = vmatmul.bf16.gmra.mxu0 %v194
    %v544 = vpop.f32.mrf.mxu0
    %v545 = vadd.f32 %v496, %v544
    %v546 = vpop.f32.mrf.mxu0
    %v547 = vadd.f32 %v498, %v546
    %548 = vmatmul.bf16.gmra.mxu0 %v196
    %v549 = vpop.f32.mrf.mxu0
    %v550 = vadd.f32 %v501, %v549
    %v551 = vpop.f32.mrf.mxu0
    %v552 = vadd.f32 %v503, %v551
    %553 = vmatmul.bf16.gmra.mxu0 %v198
    %v554 = vpop.f32.mrf.mxu0
    %v555 = vadd.f32 %v506, %v554
    %v556 = vpop.f32.mrf.mxu0
    %v557 = vadd.f32 %v508, %v556
    %558 = vmatmul.bf16.gmra.mxu0 %v200
    %v559 = vpop.f32.mrf.mxu0
    %v560 = vadd.f32 %v511, %v559
    %v561 = vpop.f32.mrf.mxu0
    %v562 = vadd.f32 %v513, %v561
    %563 = vmatmul.bf16.gmra.mxu0 %v202
    %v564 = vpop.f32.mrf.mxu0
    %v565 = vadd.f32 %v516, %v564
    %v566 = vpop.f32.mrf.mxu0
    %v567 = vadd.f32 %v518, %v566
    %568 = vmatmul.bf16.gmra.mxu0 %v204
    %v569 = vpop.f32.mrf.mxu0
    %v570 = vadd.f32 %v521, %v569
    %v571 = vpop.f32.mrf.mxu0
    %v572 = vadd.f32 %v523, %v571
    %573 = vmatmul.bf16.gmra.mxu0 %v206
    %v574 = vpop.f32.mrf.mxu0
    %v575 = vadd.f32 %v526, %v574
    %v576 = vpop.f32.mrf.mxu0
    %v577 = vadd.f32 %v528, %v576
    %578 = vdwg.mxu0
    %v579 = vld [vmem:[#allocation7] sm:$0x3]
    %v580 = vmul.f32 %v442, 2.0
    %v581 = vmul.f32 %v540, 2.0
    %v582 = vmul.f32 %v444, 2.0
    %v583 = vmul.f32 %v542, 2.0
    %v584 = vmul.f32 %v447, 2.0
    %v585 = vmul.f32 %v545, 2.0
    %v586 = vmul.f32 %v449, 2.0
    %v587 = vmul.f32 %v547, 2.0
    %v588 = vmul.f32 %v452, 2.0
    %v589 = vmul.f32 %v550, 2.0
    %v590 = vmul.f32 %v454, 2.0
    %v591 = vmul.f32 %v552, 2.0
    %v592 = vmul.f32 %v457, 2.0
    %v593 = vmul.f32 %v555, 2.0
    %v594 = vmul.f32 %v459, 2.0
    %v595 = vmul.f32 %v557, 2.0
    %v596 = vmul.f32 %v462, 2.0
    %v597 = vmul.f32 %v560, 2.0
    %v598 = vmul.f32 %v464, 2.0
    %v599 = vmul.f32 %v562, 2.0
    %v600 = vmul.f32 %v467, 2.0
    %v601 = vmul.f32 %v565, 2.0
    %v602 = vmul.f32 %v469, 2.0
    %v603 = vmul.f32 %v567, 2.0
    %v604 = vmul.f32 %v472, 2.0
    %v605 = vmul.f32 %v570, 2.0
    %v606 = vmul.f32 %v474, 2.0
    %v607 = vmul.f32 %v572, 2.0
    %v608 = vmul.f32 %v477, 2.0
    %v609 = vmul.f32 %v575, 2.0
    %v610 = vmul.f32 %v479, 2.0
    %v611 = vmul.f32 %v577, 2.0
    %v613 = vperm.slane %v579, 0
    %v614 = vperm.slane %v579, 1
    %v617 = vsub.f32 %v613, %v580
    %v618 = vsub.f32 %v614, %v581
    %v619 = vsub.f32 %v613, %v582
    %v620 = vsub.f32 %v614, %v583
    %v621 = vsub.f32 %v613, %v584
    %v622 = vsub.f32 %v614, %v585
    %v623 = vsub.f32 %v613, %v586
    %v624 = vsub.f32 %v614, %v587
    %v625 = vsub.f32 %v613, %v588
    %v626 = vsub.f32 %v614, %v589
    %v627 = vsub.f32 %v613, %v590
    %v628 = vsub.f32 %v614, %v591
    %v629 = vsub.f32 %v613, %v592
    %v630 = vsub.f32 %v614, %v593
    %v631 = vsub.f32 %v613, %v594
    %v632 = vsub.f32 %v614, %v595
    %v633 = vsub.f32 %v613, %v596
    %v634 = vsub.f32 %v614, %v597
    %v635 = vsub.f32 %v613, %v598
    %v636 = vsub.f32 %v614, %v599
    %v637 = vsub.f32 %v613, %v600
    %v638 = vsub.f32 %v614, %v601
    %v639 = vsub.f32 %v613, %v602
    %v640 = vsub.f32 %v614, %v603
    %v641 = vsub.f32 %v613, %v604
    %v642 = vsub.f32 %v614, %v605
    %v643 = vsub.f32 %v613, %v606
    %v644 = vsub.f32 %v614, %v607
    %v645 = vsub.f32 %v613, %v608
    %v646 = vsub.f32 %v614, %v609
    %v647 = vsub.f32 %v613, %v610
    %v648 = vsub.f32 %v614, %v611
    %v649 = vld [vmem:[#allocation2] sm:$0xff]
    %v650 = vld [vmem:[#allocation2 + $0x8] sm:$0xff]
    %v651 = vld [vmem:[#allocation2 + $0x10] sm:$0xff]
    %v652 = vld [vmem:[#allocation2 + $0x18] sm:$0xff]
    %v653 = vld [vmem:[#allocation2 + $0x20] sm:$0xff]
    %v654 = vld [vmem:[#allocation2 + $0x28] sm:$0xff]
    %v655 = vld [vmem:[#allocation2 + $0x30] sm:$0xff]
    %v656 = vld [vmem:[#allocation2 + $0x38] sm:$0xff]
    %v657 = vld [vmem:[#allocation2 + $0x40] sm:$0xff]
    %v658 = vld [vmem:[#allocation2 + $0x48] sm:$0xff]
    %v659 = vld [vmem:[#allocation2 + $0x50] sm:$0xff]
    %v660 = vld [vmem:[#allocation2 + $0x58] sm:$0xff]
    %v661 = vld [vmem:[#allocation2 + $0x60] sm:$0xff]
    %v662 = vld [vmem:[#allocation2 + $0x68] sm:$0xff]
    %v663 = vld [vmem:[#allocation2 + $0x70] sm:$0xff]
    %v664 = vld [vmem:[#allocation2 + $0x78] sm:$0xff]
    %v665 = vld [vmem:[#allocation2 + $0x80] sm:$0xff]
    %v666 = vld [vmem:[#allocation2 + $0x88] sm:$0xff]
    %v667 = vld [vmem:[#allocation2 + $0x90] sm:$0xff]
    %v668 = vld [vmem:[#allocation2 + $0x98] sm:$0xff]
    %v669 = vld [vmem:[#allocation2 + $0xa0] sm:$0xff]
    %v670 = vld [vmem:[#allocation2 + $0xa8] sm:$0xff]
    %v671 = vld [vmem:[#allocation2 + $0xb0] sm:$0xff]
    %v672 = vld [vmem:[#allocation2 + $0xb8] sm:$0xff]
    %v673 = vld [vmem:[#allocation2 + $0xc0] sm:$0xff]
    %v674 = vld [vmem:[#allocation2 + $0xc8] sm:$0xff]
    %v675 = vld [vmem:[#allocation2 + $0xd0] sm:$0xff]
    %v676 = vld [vmem:[#allocation2 + $0xd8] sm:$0xff]
    %v677 = vld [vmem:[#allocation2 + $0xe0] sm:$0xff]
    %v678 = vld [vmem:[#allocation2 + $0xe8] sm:$0xff]
    %v679 = vld [vmem:[#allocation2 + $0xf0] sm:$0xff]
    %v680 = vld [vmem:[#allocation2 + $0xf8] sm:$0xff]
    %v681 = vmin.f32 %v649, %v617
    %v682 = vmin.f32 %v650, %v618
    %v683 = vmin.f32 %v651, %v619
    %v684 = vmin.f32 %v652, %v620
    %v685 = vmin.f32 %v653, %v621
    %v686 = vmin.f32 %v654, %v622
    %v687 = vmin.f32 %v655, %v623
    %v688 = vmin.f32 %v656, %v624
    %v689 = vmin.f32 %v657, %v625
    %v690 = vmin.f32 %v658, %v626
    %v691 = vmin.f32 %v659, %v627
    %v692 = vmin.f32 %v660, %v628
    %v693 = vmin.f32 %v661, %v629
    %v694 = vmin.f32 %v662, %v630
    %v695 = vmin.f32 %v663, %v631
    %v696 = vmin.f32 %v664, %v632
    %v697 = vmin.f32 %v665, %v633
    %v698 = vmin.f32 %v666, %v634
    %v699 = vmin.f32 %v667, %v635
    %v700 = vmin.f32 %v668, %v636
    %v701 = vmin.f32 %v669, %v637
    %v702 = vmin.f32 %v670, %v638
    %v703 = vmin.f32 %v671, %v639
    %v704 = vmin.f32 %v672, %v640
    %v705 = vmin.f32 %v673, %v641
    %v706 = vmin.f32 %v674, %v642
    %v707 = vmin.f32 %v675, %v643
    %v708 = vmin.f32 %v676, %v644
    %v709 = vmin.f32 %v677, %v645
    %v710 = vmin.f32 %v678, %v646
    %v711 = vmin.f32 %v679, %v647
    %v712 = vmin.f32 %v680, %v648
    %713 = vst [vmem:[#allocation2] sm:$0xff] %v681
    %714 = vst [vmem:[#allocation2 + $0x8] sm:$0xff] %v682
    %715 = vst [vmem:[#allocation2 + $0x10] sm:$0xff] %v683
    %716 = vst [vmem:[#allocation2 + $0x18] sm:$0xff] %v684
    %717 = vst [vmem:[#allocation2 + $0x20] sm:$0xff] %v685
    %718 = vst [vmem:[#allocation2 + $0x28] sm:$0xff] %v686
    %719 = vst [vmem:[#allocation2 + $0x30] sm:$0xff] %v687
    %720 = vst [vmem:[#allocation2 + $0x38] sm:$0xff] %v688
    %721 = vst [vmem:[#allocation2 + $0x40] sm:$0xff] %v689
    %722 = vst [vmem:[#allocation2 + $0x48] sm:$0xff] %v690
    %723 = vst [vmem:[#allocation2 + $0x50] sm:$0xff] %v691
    %724 = vst [vmem:[#allocation2 + $0x58] sm:$0xff] %v692
    %725 = vst [vmem:[#allocation2 + $0x60] sm:$0xff] %v693
    %726 = vst [vmem:[#allocation2 + $0x68] sm:$0xff] %v694
    %727 = vst [vmem:[#allocation2 + $0x70] sm:$0xff] %v695
    %728 = vst [vmem:[#allocation2 + $0x78] sm:$0xff] %v696
    %729 = vst [vmem:[#allocation2 + $0x80] sm:$0xff] %v697
    %730 = vst [vmem:[#allocation2 + $0x88] sm:$0xff] %v698
    %731 = vst [vmem:[#allocation2 + $0x90] sm:$0xff] %v699
    %732 = vst [vmem:[#allocation2 + $0x98] sm:$0xff] %v700
    %733 = vst [vmem:[#allocation2 + $0xa0] sm:$0xff] %v701
    %734 = vst [vmem:[#allocation2 + $0xa8] sm:$0xff] %v702
    %735 = vst [vmem:[#allocation2 + $0xb0] sm:$0xff] %v703
    %736 = vst [vmem:[#allocation2 + $0xb8] sm:$0xff] %v704
    %737 = vst [vmem:[#allocation2 + $0xc0] sm:$0xff] %v705
    %738 = vst [vmem:[#allocation2 + $0xc8] sm:$0xff] %v706
    %739 = vst [vmem:[#allocation2 + $0xd0] sm:$0xff] %v707
    %740 = vst [vmem:[#allocation2 + $0xd8] sm:$0xff] %v708
    %741 = vst [vmem:[#allocation2 + $0xe0] sm:$0xff] %v709
    %742 = vst [vmem:[#allocation2 + $0xe8] sm:$0xff] %v710
    %743 = vst [vmem:[#allocation2 + $0xf0] sm:$0xff] %v711
    %744 = vst [vmem:[#allocation2 + $0xf8] sm:$0xff] %v712
    // Predicated region
    $region30: #{tpu_custom_call.1} parent=1 // pred_check
      %p745 = pneg %p59
    $region31: #{tpu_custom_call.1} parent=1 // pred_check_branch
      %747 = sbr.rel (%p745) target = $region33
    $region32: #{tpu_custom_call.1} parent=1 // pred_region
      %v748 = vld [vmem:[#allocation2] sm:$0xff]
      %v749 = vld [vmem:[#allocation2 + $0x8] sm:$0xff]
      %v750 = vld [vmem:[#allocation2 + $0x10] sm:$0xff]
      %v751 = vld [vmem:[#allocation2 + $0x18] sm:$0xff]
      %v752 = vld [vmem:[#allocation2 + $0x20] sm:$0xff]
      %v753 = vld [vmem:[#allocation2 + $0x28] sm:$0xff]
      %v754 = vld [vmem:[#allocation2 + $0x30] sm:$0xff]
      %v755 = vld [vmem:[#allocation2 + $0x38] sm:$0xff]
      %v756 = vld [vmem:[#allocation2 + $0x40] sm:$0xff]
      %v757 = vld [vmem:[#allocation2 + $0x48] sm:$0xff]
      %v758 = vld [vmem:[#allocation2 + $0x50] sm:$0xff]
      %v759 = vld [vmem:[#allocation2 + $0x58] sm:$0xff]
      %v760 = vld [vmem:[#allocation2 + $0x60] sm:$0xff]
      %v761 = vld [vmem:[#allocation2 + $0x68] sm:$0xff]
      %v762 = vld [vmem:[#allocation2 + $0x70] sm:$0xff]
      %v763 = vld [vmem:[#allocation2 + $0x78] sm:$0xff]
      %v764 = vld [vmem:[#allocation2 + $0x80] sm:$0xff]
      %v765 = vld [vmem:[#allocation2 + $0x88] sm:$0xff]
      %v766 = vld [vmem:[#allocation2 + $0x90] sm:$0xff]
      %v767 = vld [vmem:[#allocation2 + $0x98] sm:$0xff]
      %v768 = vld [vmem:[#allocation2 + $0xa0] sm:$0xff]
      %v769 = vld [vmem:[#allocation2 + $0xa8] sm:$0xff]
      %v770 = vld [vmem:[#allocation2 + $0xb0] sm:$0xff]
      %v771 = vld [vmem:[#allocation2 + $0xb8] sm:$0xff]
      %v772 = vld [vmem:[#allocation2 + $0xc0] sm:$0xff]
      %v773 = vld [vmem:[#allocation2 + $0xc8] sm:$0xff]
      %v774 = vld [vmem:[#allocation2 + $0xd0] sm:$0xff]
      %v775 = vld [vmem:[#allocation2 + $0xd8] sm:$0xff]
      %v776 = vld [vmem:[#allocation2 + $0xe0] sm:$0xff]
      %v777 = vld [vmem:[#allocation2 + $0xe8] sm:$0xff]
      %v778 = vld [vmem:[#allocation2 + $0xf0] sm:$0xff]
      %v779 = vld [vmem:[#allocation2 + $0xf8] sm:$0xff]
      %v780 = vmin.f32 %v748, %v749
      %781 = vmin.xlane.f32.xlu0 %v780
      %v782 = vpop.xlane.xlu0 %781
      %v783 = vmin.f32 %v750, %v751
      %784 = vmin.xlane.f32.xlu0 %v783
      %v785 = vpop.xlane.xlu0 %784
      %v786 = vmin.f32 %v752, %v753
      %787 = vmin.xlane.f32.xlu0 %v786
      %v788 = vpop.xlane.xlu0 %787
      %v789 = vmin.f32 %v754, %v755
      %790 = vmin.xlane.f32.xlu0 %v789
      %v791 = vpop.xlane.xlu0 %790
      %v792 = vmin.f32 %v756, %v757
      %793 = vmin.xlane.f32.xlu0 %v792
      %v794 = vpop.xlane.xlu0 %793
      %v795 = vmin.f32 %v758, %v759
      %796 = vmin.xlane.f32.xlu0 %v795
      %v797 = vpop.xlane.xlu0 %796
      %v798 = vmin.f32 %v760, %v761
      %799 = vmin.xlane.f32.xlu0 %v798
      %v800 = vpop.xlane.xlu0 %799
      %v801 = vmin.f32 %v762, %v763
      %802 = vmin.xlane.f32.xlu0 %v801
      %v803 = vpop.xlane.xlu0 %802
      %v804 = vmin.f32 %v764, %v765
      %805 = vmin.xlane.f32.xlu0 %v804
      %v806 = vpop.xlane.xlu0 %805
      %v807 = vmin.f32 %v766, %v767
      %808 = vmin.xlane.f32.xlu0 %v807
      %v809 = vpop.xlane.xlu0 %808
      %v810 = vmin.f32 %v768, %v769
      %811 = vmin.xlane.f32.xlu0 %v810
      %v812 = vpop.xlane.xlu0 %811
      %v813 = vmin.f32 %v770, %v771
      %814 = vmin.xlane.f32.xlu0 %v813
      %v815 = vpop.xlane.xlu0 %814
      %v816 = vmin.f32 %v772, %v773
      %817 = vmin.xlane.f32.xlu0 %v816
      %v818 = vpop.xlane.xlu0 %817
      %v819 = vmin.f32 %v774, %v775
      %820 = vmin.xlane.f32.xlu0 %v819
      %v821 = vpop.xlane.xlu0 %820
      %v822 = vmin.f32 %v776, %v777
      %823 = vmin.xlane.f32.xlu0 %v822
      %v824 = vpop.xlane.xlu0 %823
      %v825 = vmin.f32 %v778, %v779
      %826 = vmin.xlane.f32.xlu0 %v825
      %v827 = vpop.xlane.xlu0 %826
      %vm828 = vcmask 7168
      %829 = vst.msk [vmem:[%s3] sm:$0xff] %vm828, %v782
      %830 = vst.msk [vmem:[%s3 + $0x8] sm:$0xff] %vm828, %v785
      %831 = vst.msk [vmem:[%s3 + $0x10] sm:$0xff] %vm828, %v788
      %832 = vst.msk [vmem:[%s3 + $0x18] sm:$0xff] %vm828, %v791
      %833 = vst.msk [vmem:[%s3 + $0x20] sm:$0xff] %vm828, %v794
      %834 = vst.msk [vmem:[%s3 + $0x28] sm:$0xff] %vm828, %v797
      %835 = vst.msk [vmem:[%s3 + $0x30] sm:$0xff] %vm828, %v800
      %836 = vst.msk [vmem:[%s3 + $0x38] sm:$0xff] %vm828, %v803
      %837 = vst.msk [vmem:[%s3 + $0x40] sm:$0xff] %vm828, %v806
      %838 = vst.msk [vmem:[%s3 + $0x48] sm:$0xff] %vm828, %v809
      %839 = vst.msk [vmem:[%s3 + $0x50] sm:$0xff] %vm828, %v812
      %840 = vst.msk [vmem:[%s3 + $0x58] sm:$0xff] %vm828, %v815
      %841 = vst.msk [vmem:[%s3 + $0x60] sm:$0xff] %vm828, %v818
      %842 = vst.msk [vmem:[%s3 + $0x68] sm:$0xff] %vm828, %v821
      %843 = vst.msk [vmem:[%s3 + $0x70] sm:$0xff] %vm828, %v824
      %844 = vst.msk [vmem:[%s3 + $0x78] sm:$0xff] %vm828, %v827
    $region33: #{tpu_custom_call.1} parent=1 // pred_fallthru
      _
    // Predicated region
    $region34: #{tpu_custom_call.1} parent=1 // pred_check
      _
    $region35: #{tpu_custom_call.1} parent=1 // pred_check_branch
      %846 = sbr.rel (0) target = $region37
    $region36: #{tpu_custom_call.1} parent=1 // pred_region
      _
    $region37: #{tpu_custom_call.1} parent=1 // pred_fallthru
      _
    // Predicated region
    $region38: #{tpu_custom_call.1} parent=1 // pred_check
      _
    $region39: #{tpu_custom_call.1} parent=1 // pred_check_branch
      %848 = sbr.rel (0) target = $region41
    $region40: #{tpu_custom_call.1} parent=1 // pred_region
      _
    $region41: #{tpu_custom_call.1} parent=1 // pred_fallthru
      _
    %849 = vsyncpa [#allocation4], 1
    %850 = vsyncpa [#allocation6], 1

</llo_original>
